<compile_context>
chip_gen: v7x
topology: tpu7x:2x2x1
jax: 0.10.0
libtpu: 0.0.40
codegen_flags: <defaults>
</compile_context>

<pallas_src>
import math

import jax
import jax.numpy as jnp
from jax import lax
from jax.experimental import pallas as pl
from jax.experimental.pallas import tpu as pltpu

# ---- synthetic hyperparameters (small, consistent with the module) ----------
BATCH = 2
IN_CHANNEL_G = 4      # "colors" of the feature map handed to forward()
FEAT_H = 8
FEAT_W = 8
DOWN_DIM = IN_CHANNEL_G * FEAT_H * FEAT_W      # D = 256
HIDDEN = DOWN_DIM // 2                          # D//2 = 128
LN_EPS = 0.8                                    # nn.LayerNorm(down_dim//2, 0.8) -- keep faithfully
LEAKY_SLOPE = 0.2


def _discriminator_kernel(x_ref, w1_ref, p_ref, b2_ref, o_ref):
    """Fused Linear -> LayerNorm(eps=0.8) -> LeakyReLU(0.2) -> Linear on a (TM, D) tile.

    p_ref packs [b1; gamma; beta; w2_row] as a (4, H) f32 block.
    Output is written lane-dense as a (1, TM) row.
    """
    # fc[0]: Linear(D, H) -- bf16 operands on the MXU, f32 accumulation.
    x = x_ref[...].astype(jnp.bfloat16)                               # (TM, D)
    h = jnp.dot(x, w1_ref[...], preferred_element_type=jnp.float32)   # (TM, H) f32

    p = p_ref[...]                                                    # (4, H) f32
    h = h + p[0:1, :]                                                 # + b1

    # fc[1]: LayerNorm(H, eps=0.8) -- biased variance, torch semantics, f32 VPU math.
    mean = jnp.mean(h, axis=-1, keepdims=True)                        # (TM, 1)
    cent = h - mean
    var = jnp.mean(cent * cent, axis=-1, keepdims=True)               # (TM, 1)
    ln = cent * lax.rsqrt(var + LN_EPS)
    ln = ln * p[1:2, :] + p[2:3, :]                                   # affine (gamma, beta)

    # fc[2]: LeakyReLU(0.2)
    act = jnp.where(ln > 0, ln, LEAKY_SLOPE * ln)

    # fc[3]: Linear(H, 1) as VPU multiply + lane reduction; result kept lane-dense.
    row = jnp.sum(act * p[3:4, :], axis=-1) + b2_ref[0]               # (TM,), b2 from SMEM
    o_ref[...] = row[None, :].astype(o_ref.dtype)                     # (1, TM) lane-dense store


def _choose_tm(padded8):
    """Pick the batch-tile row count.

    Tiny batches (< 256 padded rows): a single tile -- the call is launch /
    prologue-DMA latency bound and splitting is pointless.  Otherwise take
    ~half the padded batch, 128-aligned (keeps the lane-dense (1, tm) output
    block legal and gives the grid >= 2 steps so both v7x TensorCores split the
    x stream), capped at 2048 rows: a (2048, 256) f32 x tile is 2 MiB, so
    double-buffered it sits comfortably inside the default scoped VMEM on
    v5e (16 MiB), v6e (32 MiB) and v7x (32 MiB).
    """
    if padded8 < 256:
        return padded8
    tm = max(128, (padded8 // 2 // 128) * 128)
    return min(tm, 2048)


def discriminator_forward(x, params, *, tm=None):
    """x: (B, C, H, W) float32 (or bfloat16). Returns (B, 1) float32."""
    B = x.shape[0]
    D = math.prod(x.shape[1:])
    assert D == DOWN_DIM, (D, DOWN_DIM)
    x_flat = x.reshape(B, D)                                          # torch .view(B, -1)
    w1t_bf16, fc_vecs, b2 = params

    padded8 = max(8, pl.cdiv(B, 8) * 8)
    if tm is None:
        tm = _choose_tm(padded8)
    padded_b = pl.cdiv(B, tm) * tm
    if padded_b != B:
        # Zero rows are harmless through the LayerNorm (h = b1, var(b1) + 0.8 > 0),
        # and they are sliced off before return.
        x_flat = jnp.pad(x_flat, ((0, padded_b - B), (0, 0)))
    grid = (padded_b // tm,)

    const_map = lambda i: (0, 0)   # weights/params: same block every step -> resident in VMEM
    x_bytes = padded_b * DOWN_DIM * x_flat.dtype.itemsize
    cost = pl.CostEstimate(
        flops=2 * padded_b * DOWN_DIM * HIDDEN + 12 * padded_b * HIDDEN,
        transcendentals=padded_b,                       # one rsqrt per row
        bytes_accessed=(x_bytes                         # x stream (dominant term)
                        + DOWN_DIM * HIDDEN * 2         # w1 (bf16), resident
                        + 4 * HIDDEN * 4                # packed b1/gamma/beta/w2
                        + 4                             # b2 scalar
                        + padded_b * 4),                # output row
    )

    out_row = pl.pallas_call(
        _discriminator_kernel,
        out_shape=jax.ShapeDtypeStruct((1, padded_b), jnp.float32),
        grid=grid,
        in_specs=[
            # x tile, streamed over the batch.  (v7x note: if xprof shows exposed
            # x-DMA at large batch, add pipeline_mode=pl.Buffered(3) here.)
            pl.BlockSpec((tm, DOWN_DIM), lambda i: (i, 0)),
            pl.BlockSpec((DOWN_DIM, HIDDEN), const_map),        # w1 (bf16), resident
            pl.BlockSpec((4, HIDDEN), const_map),               # packed b1/gamma/beta/w2 row
            pl.BlockSpec(memory_space=pltpu.MemorySpace.SMEM),  # b2 scalar
        ],
        out_specs=pl.BlockSpec((1, tm), lambda i: (0, i)),      # lane-dense output slab
        compiler_params=pltpu.CompilerParams(
            dimension_semantics=("parallel",)),
        cost_estimate=cost,
    )(x_flat, w1t_bf16, fc_vecs, b2)

    return out_row[0, :B].reshape(B, 1)


def init_params(key):
    """Deterministic init mimicking torch defaults (uniform fan-in bounds)."""
    k1, k2, k3, k4 = jax.random.split(key, 4)
    bound1 = 1.0 / math.sqrt(DOWN_DIM)
    bound2 = 1.0 / math.sqrt(HIDDEN)
    # Linear(D, H): torch weight is (H, D); store transposed (D, H), cast to bf16.
    w1t = jax.random.uniform(k1, (DOWN_DIM, HIDDEN), jnp.float32, -bound1, bound1)
    w1t_bf16 = w1t.astype(jnp.bfloat16)
    b1 = jax.random.uniform(k2, (HIDDEN,), jnp.float32, -bound1, bound1)
    # LayerNorm affine params.
    gamma = jnp.ones((HIDDEN,), jnp.float32)
    beta = jnp.zeros((HIDDEN,), jnp.float32)
    # Linear(H, 1): torch weight (1, H); keep as a lane-dense row for the VPU path.
    w2_row = jax.random.uniform(k3, (HIDDEN,), jnp.float32, -bound2, bound2)
    b2 = jax.random.uniform(k4, (1,), jnp.float32, -bound2, bound2)
    # Pack the four (H,) vectors into one (4, H) block -> single resident DMA.
    fc_vecs = jnp.stack([b1, gamma, beta, w2_row], axis=0)
    return (w1t_bf16, fc_vecs, b2)


def _reference_forward(x, params):
    """Pure-JAX reference mirroring the torch semantics (with bf16 weight/x rounding)."""
    w1t_bf16, fc_vecs, b2 = params
    b1, gamma, beta, w2_row = fc_vecs[0], fc_vecs[1], fc_vecs[2], fc_vecs[3]
    xq = x.reshape(x.shape[0], -1).astype(jnp.bfloat16).astype(jnp.float32)
    w1 = w1t_bf16.astype(jnp.float32)
    h = jnp.dot(xq, w1, precision=lax.Precision.HIGHEST) + b1
    mean = jnp.mean(h, axis=-1, keepdims=True)
    var = jnp.mean((h - mean) ** 2, axis=-1, keepdims=True)
    ln = (h - mean) * lax.rsqrt(var + LN_EPS) * gamma + beta
    act = jnp.where(ln > 0, ln, LEAKY_SLOPE * ln)
    return jnp.sum(act * w2_row, axis=-1, keepdims=True) + b2


if __name__ == "__main__":
    key = jax.random.PRNGKey(0)
    k_x, k_p = jax.random.split(key)
    x = jax.random.normal(k_x, (BATCH, IN_CHANNEL_G, FEAT_H, FEAT_W), jnp.float32)
    params = init_params(k_p)

    out = discriminator_forward(x, params)
    out = jax.block_until_ready(out)

    ref = _reference_forward(x, params)
    assert out.shape == (BATCH, 1), out.shape
    assert jnp.allclose(out, ref, atol=2e-3, rtol=2e-3), (out, ref)

    print("KERNEL_OK")
</pallas_src>

<mosaic_0001>
module attributes {stable_mosaic.version = 11 : i64} {
  func.func @_discriminator_kernel(%arg0: i32, %arg1: memref<8x256xf32, #tpu.memory_space<vmem>>, %arg2: memref<256x128xbf16, #tpu.memory_space<vmem>>, %arg3: memref<4x128xf32, #tpu.memory_space<vmem>>, %arg4: memref<1xf32, #tpu.memory_space<smem>>, %arg5: memref<1x8xf32, #tpu.memory_space<vmem>>) attributes {dimension_semantics = [#tpu.dimension_semantics<parallel>], iteration_bounds = array<i64: 1>, scalar_prefetch = 0 : i64, scratch_operands = 0 : i64, tpu.core_type = #tpu.core_type<tc>, window_params = [{transform_indices = @transform_0, window_bounds = array<i64: 8, 256>}, {pipeline_mode = #tpu.pipeline_mode<synchronous>, transform_indices = @transform_1, window_bounds = array<i64: 256, 128>}, {pipeline_mode = #tpu.pipeline_mode<synchronous>, transform_indices = @transform_2, window_bounds = array<i64: 4, 128>}, {transform_indices = @transform_3, window_bounds = array<i64: 1>}, {transform_indices = @transform_4, window_bounds = array<i64: 1, 8>}]} {
    %c0 = arith.constant 0 : index
    %c0_0 = arith.constant 0 : index
    %0 = vector.load %arg1[%c0, %c0_0] : memref<8x256xf32, #tpu.memory_space<vmem>>, vector<8x256xf32>
    %1 = arith.truncf %0 : vector<8x256xf32> to vector<8x256xbf16>
    %c0_1 = arith.constant 0 : index
    %c0_2 = arith.constant 0 : index
    %2 = vector.load %arg2[%c0_1, %c0_2] : memref<256x128xbf16, #tpu.memory_space<vmem>>, vector<256x128xbf16>
    %cst = arith.constant dense<0.000000e+00> : vector<8x128xf32>
    %3 = tpu.matmul %1, %2, %cst {dimension_numbers = #tpu.dot_dimension_numbers<[1], [0], [0], [1], [0, 0, 1, 1], [], []>} : vector<8x256xbf16>, vector<256x128xbf16>, vector<8x128xf32> -> vector<8x128xf32>
    %c0_3 = arith.constant 0 : index
    %c0_4 = arith.constant 0 : index
    %4 = vector.load %arg3[%c0_3, %c0_4] : memref<4x128xf32, #tpu.memory_space<vmem>>, vector<4x128xf32>
    %5 = vector.extract_strided_slice %4 {offsets = [0, 0], sizes = [1, 128], strides = [1, 1]} : vector<4x128xf32> to vector<1x128xf32>
    %6 = vector.broadcast %5 : vector<1x128xf32> to vector<8x128xf32>
    %7 = arith.addf %3, %6 : vector<8x128xf32>
    %cst_5 = arith.constant dense<0.000000e+00> : vector<8xf32>
    %8 = vector.multi_reduction <add>, %7, %cst_5 [1] : vector<8x128xf32> to vector<8xf32>
    %9 = vector.shape_cast %8 : vector<8xf32> to vector<8x1xf32>
    %cst_6 = arith.constant 1.280000e+02 : f32
    %10 = vector.broadcast %cst_6 : f32 to vector<8x1xf32>
    %11 = arith.divf %9, %10 : vector<8x1xf32>
    %12 = vector.broadcast %11 : vector<8x1xf32> to vector<8x128xf32>
    %13 = arith.subf %7, %12 : vector<8x128xf32>
    %14 = arith.mulf %13, %13 : vector<8x128xf32>
    %cst_7 = arith.constant dense<0.000000e+00> : vector<8xf32>
    %15 = vector.multi_reduction <add>, %14, %cst_7 [1] : vector<8x128xf32> to vector<8xf32>
    %16 = vector.shape_cast %15 : vector<8xf32> to vector<8x1xf32>
    %cst_8 = arith.constant 1.280000e+02 : f32
    %17 = vector.broadcast %cst_8 : f32 to vector<8x1xf32>
    %18 = arith.divf %16, %17 : vector<8x1xf32>
    %cst_9 = arith.constant 8.000000e-01 : f32
    %19 = vector.broadcast %cst_9 : f32 to vector<8x1xf32>
    %20 = arith.addf %18, %19 : vector<8x1xf32>
    %21 = math.rsqrt %20 : vector<8x1xf32>
    %22 = vector.broadcast %21 : vector<8x1xf32> to vector<8x128xf32>
    %23 = arith.mulf %13, %22 : vector<8x128xf32>
    %24 = vector.extract_strided_slice %4 {offsets = [1, 0], sizes = [1, 128], strides = [1, 1]} : vector<4x128xf32> to vector<1x128xf32>
    %25 = vector.broadcast %24 : vector<1x128xf32> to vector<8x128xf32>
    %26 = arith.mulf %23, %25 : vector<8x128xf32>
    %27 = vector.extract_strided_slice %4 {offsets = [2, 0], sizes = [1, 128], strides = [1, 1]} : vector<4x128xf32> to vector<1x128xf32>
    %28 = vector.broadcast %27 : vector<1x128xf32> to vector<8x128xf32>
    %29 = arith.addf %26, %28 : vector<8x128xf32>
    %cst_10 = arith.constant 0.000000e+00 : f32
    %30 = vector.broadcast %cst_10 : f32 to vector<8x128xf32>
    %31 = arith.cmpf ogt, %29, %30 : vector<8x128xf32>
    %cst_11 = arith.constant 2.000000e-01 : f32
    %32 = vector.broadcast %cst_11 : f32 to vector<8x128xf32>
    %33 = arith.mulf %32, %29 : vector<8x128xf32>
    %34 = arith.select %31, %29, %33 : vector<8x128xi1>, vector<8x128xf32>
    %35 = vector.extract_strided_slice %4 {offsets = [3, 0], sizes = [1, 128], strides = [1, 1]} : vector<4x128xf32> to vector<1x128xf32>
    %36 = vector.broadcast %35 : vector<1x128xf32> to vector<8x128xf32>
    %37 = arith.mulf %34, %36 : vector<8x128xf32>
    %cst_12 = arith.constant dense<0.000000e+00> : vector<8xf32>
    %38 = vector.multi_reduction <add>, %37, %cst_12 [1] : vector<8x128xf32> to vector<8xf32>
    %c0_13 = arith.constant 0 : index
    %39 = memref.load %arg4[%c0_13] : memref<1xf32, #tpu.memory_space<smem>>
    %40 = vector.broadcast %39 : f32 to vector<8xf32>
    %41 = arith.addf %38, %40 : vector<8xf32>
    %42 = vector.shape_cast %41 : vector<8xf32> to vector<1x8xf32>
    %c0_14 = arith.constant 0 : index
    %c0_15 = arith.constant 0 : index
    %43 = vector.load %arg5[%c0_14, %c0_15] : memref<1x8xf32, #tpu.memory_space<vmem>>, vector<1x8xf32>
    tpu.vector_store %arg5[%c0_14, %c0_15], %42 {strides = array<i32>} : memref<1x8xf32, #tpu.memory_space<vmem>>, vector<1x8xf32>,
    return
  }
  func.func @transform_0(%arg0: i32) -> (i32, i32) {
    %c0_i32 = arith.constant 0 : i32
    %c0_i32_0 = arith.constant 0 : i32
    return %arg0, %c0_i32 : i32, i32
  }
  func.func @transform_1(%arg0: i32) -> (i32, i32) {
    %c0_i32 = arith.constant 0 : i32
    %c0_i32_0 = arith.constant 0 : i32
    %c0_i32_1 = arith.constant 0 : i32
    return %c0_i32, %c0_i32_0 : i32, i32
  }
  func.func @transform_2(%arg0: i32) -> (i32, i32) {
    %c0_i32 = arith.constant 0 : i32
    %c0_i32_0 = arith.constant 0 : i32
    %c0_i32_1 = arith.constant 0 : i32
    return %c0_i32, %c0_i32_0 : i32, i32
  }
  func.func @transform_3(%arg0: i32) -> i32 {
    %c0_i32 = arith.constant 0 : i32
    %c0_i32_0 = arith.constant 0 : i32
    return %c0_i32 : i32
  }
  func.func @transform_4(%arg0: i32) -> (i32, i32) {
    %c0_i32 = arith.constant 0 : i32
    %c0_i32_0 = arith.constant 0 : i32
    return %c0_i32, %arg0 : i32, i32
  }
}

</mosaic_0001>

<llo_original>
// kernel: tpu_custom_call.1
$region0: #{tpu_custom_call.1}
  #allocation0 [shape = 'u32[]', space=smem, size = 0x4, offset = 0x4, fixed_abs, tag = 'smem constant byte address 0x4 - core index']
  #allocation1 [shape = 'u32[144,128]{1,0:T(1,128)}', space=vmem, size = 0x12000, scoped, tag = 'internal scratch']
  #allocation2 [shape = 'f32[1]{0:T(128)S(6)}', space=smem, size = 0x200, scoped, tag = 'scoped memory for tpu_custom_call.1']
  %s0 = inlined_call_operand.hbm [shape: f32[8,256], index: 0, kind: input, shape index: {}]
  %s1 = inlined_call_operand.hbm [shape: bf16[256,128], index: 1, kind: input, shape index: {}]
  %s2 = inlined_call_operand.vmem [shape: f32[4,128], index: 2, kind: input, shape index: {}]
  %s3 = inlined_call_operand.<no memory space> [shape: f32[1], index: 3, kind: input, shape index: {}]
  %s4 = inlined_call_operand.hbm [shape: f32[1,8], index: 4, kind: output, shape index: {}]
  %s5 = sld [smem:[#allocation0]]
  $region34: #{tpu_custom_call.1} parent=0
    _
  %s7 = ssub.s32 1, %s5
  %s8 = scalar_select 0, %s7, %s5
  %9 = sst [smem:[#allocation2]] %s3
  $region1: #{tpu_custom_call.1} parent=0
    #allocation3 [shape = 'u8[8192]{0}', space=vmem, size = 0x2000, scoped, tag = 'input window, operand 0, single buffered']
    #allocation4 [shape = 's32[1]{0}', space=sflag, size = 0x4, scoped, tag = 'scoped memory for tpu_custom_call.1']
    #allocation5 [shape = 's32[1]{0}', space=sflag, size = 0x4, scoped, tag = 'scoped memory for tpu_custom_call.1']
    #allocation6 [shape = 'u8[65536]{0}', space=vmem, size = 0x10000, scoped, tag = 'input window, operand 1, single buffered']
    #allocation7 [shape = 's32[1]{0}', space=sflag, size = 0x4, scoped, tag = 'scoped memory for tpu_custom_call.1']
    #allocation8 [shape = 'u8[512]{0}', space=vmem, size = 0x400, scoped, tag = 'output window, operand 0, single buffered']
    %10 = vsyncpa [#allocation4], 0
    %11 = vsyncpa [#allocation7], 0
    %12 = vsyncpa [#allocation5], 0
    // Predicated region
    $region2: #{tpu_custom_call.1} parent=1 // pred_check
      _
    $region3: #{tpu_custom_call.1} parent=1 // pred_check_branch
      %14 = sbr.rel (0) target = $region5
    $region4: #{tpu_custom_call.1} parent=1 // pred_region
      %s16 = ssub.s32 256, 256
      %17 = vsyncadd [#allocation4], %s16
      %s19 = sshll.u32 [#allocation3], 4
      %s20 = int_to_ptr.vmem [resolvable:$true] %s19
      %22 = dma.hbm_to_vmem [thread:$0]  %s0, 256, %s20, [#allocation4]
    $region5: #{tpu_custom_call.1} parent=1 // pred_fallthru
      _
    // Predicated region
    $region6: #{tpu_custom_call.1} parent=1 // pred_check
      _
    $region7: #{tpu_custom_call.1} parent=1 // pred_check_branch
      %24 = sbr.rel (0) target = $region9
    $region8: #{tpu_custom_call.1} parent=1 // pred_region
      %s26 = ssub.s32 2048, 2048
      %27 = vsyncadd [#allocation7], %s26
      %s28 = sshll.u32 [#allocation6], 4
      %s29 = int_to_ptr.vmem [resolvable:$true] %s28
      %34 = dma.hbm_to_vmem [thread:$0]  %s1, 2048, %s29, [#allocation7], 64, 64, 4
    $region9: #{tpu_custom_call.1} parent=1 // pred_fallthru
      _
    // Predicated region
    $region10: #{tpu_custom_call.1} parent=1 // pred_check
      _
    $region11: #{tpu_custom_call.1} parent=1 // pred_check_branch
      %36 = sbr.rel (0) target = $region13
    $region12: #{tpu_custom_call.1} parent=1 // pred_region
      _
    $region13: #{tpu_custom_call.1} parent=1 // pred_fallthru
      _
    // Predicated region
    $region14: #{tpu_custom_call.1} parent=1 // pred_check
      _
    $region15: #{tpu_custom_call.1} parent=1 // pred_check_branch
      %38 = sbr.rel (0) target = $region17
    $region16: #{tpu_custom_call.1} parent=1 // pred_region
      _
    $region17: #{tpu_custom_call.1} parent=1 // pred_fallthru
      _
    // Predicated region
    $region18: #{tpu_custom_call.1} parent=1 // pred_check
      _
    $region19: #{tpu_custom_call.1} parent=1 // pred_check_branch
      %40 = sbr.rel (0) target = $region21
    $region20: #{tpu_custom_call.1} parent=1 // pred_region
      %41 = dma.done [#allocation4], 256
    $region21: #{tpu_custom_call.1} parent=1 // pred_fallthru
      _
    // Predicated region
    $region22: #{tpu_custom_call.1} parent=1 // pred_check
      _
    $region23: #{tpu_custom_call.1} parent=1 // pred_check_branch
      %43 = sbr.rel (0) target = $region25
    $region24: #{tpu_custom_call.1} parent=1 // pred_region
      %44 = dma.done [#allocation7], 2048
    $region25: #{tpu_custom_call.1} parent=1 // pred_fallthru
      _
    %v46 = vld [vmem:[#allocation3] sm:$0xff]
    %v47 = vld [vmem:[#allocation3 + $0x8] sm:$0xff]
    %v48 = vpack.c.bf16 %v46, %v46
    %v49 = vpack.c.bf16 %v47, %v47
    %v50 = vld [vmem:[#allocation6] sm:$0xf]
    %v51 = vld [vmem:[#allocation6 + $0x4] sm:$0xf]
    %v52 = vld [vmem:[#allocation6 + $0x8] sm:$0xf]
    %v53 = vld [vmem:[#allocation6 + $0xc] sm:$0xf]
    %v54 = vld [vmem:[#allocation6 + $0x10] sm:$0xf]
    %v55 = vld [vmem:[#allocation6 + $0x14] sm:$0xf]
    %v56 = vld [vmem:[#allocation6 + $0x18] sm:$0xf]
    %v57 = vld [vmem:[#allocation6 + $0x1c] sm:$0xf]
    %v58 = vld [vmem:[#allocation6 + $0x20] sm:$0xf]
    %v59 = vld [vmem:[#allocation6 + $0x24] sm:$0xf]
    %v60 = vld [vmem:[#allocation6 + $0x28] sm:$0xf]
    %v61 = vld [vmem:[#allocation6 + $0x2c] sm:$0xf]
    %v62 = vld [vmem:[#allocation6 + $0x30] sm:$0xf]
    %v63 = vld [vmem:[#allocation6 + $0x34] sm:$0xf]
    %v64 = vld [vmem:[#allocation6 + $0x38] sm:$0xf]
    %v65 = vld [vmem:[#allocation6 + $0x3c] sm:$0xf]
    %v66 = vld [vmem:[#allocation6 + $0x40] sm:$0xf]
    %v67 = vld [vmem:[#allocation6 + $0x44] sm:$0xf]
    %v68 = vld [vmem:[#allocation6 + $0x48] sm:$0xf]
    %v69 = vld [vmem:[#allocation6 + $0x4c] sm:$0xf]
    %v70 = vld [vmem:[#allocation6 + $0x50] sm:$0xf]
    %v71 = vld [vmem:[#allocation6 + $0x54] sm:$0xf]
    %v72 = vld [vmem:[#allocation6 + $0x58] sm:$0xf]
    %v73 = vld [vmem:[#allocation6 + $0x5c] sm:$0xf]
    %v74 = vld [vmem:[#allocation6 + $0x60] sm:$0xf]
    %v75 = vld [vmem:[#allocation6 + $0x64] sm:$0xf]
    %v76 = vld [vmem:[#allocation6 + $0x68] sm:$0xf]
    %v77 = vld [vmem:[#allocation6 + $0x6c] sm:$0xf]
    %v78 = vld [vmem:[#allocation6 + $0x70] sm:$0xf]
    %v79 = vld [vmem:[#allocation6 + $0x74] sm:$0xf]
    %v80 = vld [vmem:[#allocation6 + $0x78] sm:$0xf]
    %v81 = vld [vmem:[#allocation6 + $0x7c] sm:$0xf]
    %v82 = vld [vmem:[%s2] sm:$0xf]
    %v83 = vlaneseq
    %v84 = vshrl.u32 %v83, 7
    %v85 = vsub.s32 0, %v84
    %v86 = vrot.slane %v82, %v85
    %v119 = vunpack.c.l.b16 %v50
    %v120 = vunpack.c.l.b16 %v51
    %v121 = vunpack.c.l.b16 %v52
    %v122 = vunpack.c.l.b16 %v53
    %v123 = vunpack.c.l.b16 %v54
    %v124 = vunpack.c.l.b16 %v55
    %v125 = vunpack.c.l.b16 %v56
    %v126 = vunpack.c.l.b16 %v57
    %v127 = vunpack.c.l.b16 %v58
    %v128 = vunpack.c.l.b16 %v59
    %v129 = vunpack.c.l.b16 %v60
    %v130 = vunpack.c.l.b16 %v61
    %v131 = vunpack.c.l.b16 %v62
    %v132 = vunpack.c.l.b16 %v63
    %v133 = vunpack.c.l.b16 %v64
    %v134 = vunpack.c.l.b16 %v65
    %v135 = vunpack.c.l.b16 %v66
    %v136 = vunpack.c.l.b16 %v67
    %v137 = vunpack.c.l.b16 %v68
    %v138 = vunpack.c.l.b16 %v69
    %v139 = vunpack.c.l.b16 %v70
    %v140 = vunpack.c.l.b16 %v71
    %v141 = vunpack.c.l.b16 %v72
    %v142 = vunpack.c.l.b16 %v73
    %v143 = vunpack.c.l.b16 %v74
    %v144 = vunpack.c.l.b16 %v75
    %v145 = vunpack.c.l.b16 %v76
    %v146 = vunpack.c.l.b16 %v77
    %v147 = vunpack.c.l.b16 %v78
    %v148 = vunpack.c.l.b16 %v79
    %v149 = vunpack.c.l.b16 %v80
    %v150 = vunpack.c.l.b16 %v81
    %v151 = vpack.c.b16 %v120, %v119
    %v152 = vpack.c.b16 %v122, %v121
    %v153 = vpack.c.b16 %v124, %v123
    %v154 = vpack.c.b16 %v126, %v125
    %v155 = vpack.c.b16 %v128, %v127
    %v156 = vpack.c.b16 %v130, %v129
    %v157 = vpack.c.b16 %v132, %v131
    %v158 = vpack.c.b16 %v134, %v133
    %v159 = vpack.c.b16 %v136, %v135
    %v160 = vpack.c.b16 %v138, %v137
    %v161 = vpack.c.b16 %v140, %v139
    %v162 = vpack.c.b16 %v142, %v141
    %v163 = vpack.c.b16 %v144, %v143
    %v164 = vpack.c.b16 %v146, %v145
    %v165 = vpack.c.b16 %v148, %v147
    %v166 = vpack.c.b16 %v150, %v149
    %183 = vmatprep.subr.bf16.mxu0 0
    %184 = vmatpush1.bf16.msra.mxu0 %v151
    %185 = vmatprep.subr.bf16.mxu0 0
    %186 = vmatpush1.bf16.msra.mxu0 %v152
    %187 = vmatprep.subr.bf16.mxu0 0
    %188 = vmatpush1.bf16.msra.mxu0 %v153
    %189 = vmatprep.subr.bf16.mxu0 0
    %190 = vmatpush1.bf16.msra.mxu0 %v154
    %191 = vmatprep.subr.bf16.mxu0 0
    %192 = vmatpush1.bf16.msra.mxu0 %v155
    %193 = vmatprep.subr.bf16.mxu0 0
    %194 = vmatpush1.bf16.msra.mxu0 %v156
    %195 = vmatprep.subr.bf16.mxu0 0
    %196 = vmatpush1.bf16.msra.mxu0 %v157
    %197 = vmatprep.subr.bf16.mxu0 0
    %198 = vmatpush1.bf16.msra.mxu0 %v158
    %199 = vmatprep.subr.bf16.mxu0 0
    %200 = vmatpush1.bf16.msra.mxu0 %v159
    %201 = vmatprep.subr.bf16.mxu0 0
    %202 = vmatpush1.bf16.msra.mxu0 %v160
    %203 = vmatprep.subr.bf16.mxu0 0
    %204 = vmatpush1.bf16.msra.mxu0 %v161
    %205 = vmatprep.subr.bf16.mxu0 0
    %206 = vmatpush1.bf16.msra.mxu0 %v162
    %207 = vmatprep.subr.bf16.mxu0 0
    %208 = vmatpush1.bf16.msra.mxu0 %v163
    %209 = vmatprep.subr.bf16.mxu0 0
    %210 = vmatpush1.bf16.msra.mxu0 %v164
    %211 = vmatprep.subr.bf16.mxu0 0
    %212 = vmatpush1.bf16.msra.mxu0 %v165
    %213 = vmatprep.subr.bf16.mxu0 0
    %214 = vmatpush1.bf16.msra.mxu0 %v166
    %215 = vmatprep.mubr.bf16.mxu0 %v49
    %216 = vmatmul.mubr.bf16.gmra.mrb[0].mxu0 %v48
    %v217 = vpop.f32.mrb[0].mxu0
    %v218 = vadd.f32 %v86, %v217
    %v219 = vpop.f32.mrb[0].mxu0
    %v220 = vpop.f32.mrb[0].mxu0
    %v221 = vpop.f32.mrb[0].mxu0
    %222 = vdwg.mxu0
    %223 = vadd.xlane.f32.xlu0 %v218
    %v224 = vpop.xlane.xlu0 %223
    %v225 = vrcp.pop 128.0
    %v226 = vmul.f32 %v224, %v225
    %v227 = vsub.f32 %v218, %v226
    %v228 = vmul.f32 %v227, %v227
    %229 = vadd.xlane.f32.xlu0 %v228
    %v230 = vpop.xlane.xlu0 %229
    %v231 = vmul.f32 %v230, %v225
    %v232 = vadd.f32 %v231, 0.8
    %v233 = vrsqrt.pop %v232
    %v234 = vmul.f32 %v227, %v233
    %v235 = vlaneseq
    %v236 = vshrl.u32 %v235, 7
    %v237 = vsub.s32 1, %v236
    %v238 = vrot.slane %v82, %v237
    %v239 = vmul.f32 %v234, %v238
    %v240 = vlaneseq
    %v241 = vshrl.u32 %v240, 7
    %v242 = vsub.s32 2, %v241
    %v243 = vrot.slane %v82, %v242
    %v244 = vadd.f32 %v239, %v243
    %vm245 = vcmp.gt.f32.partialorder %v244, 0.0
    %v246 = vmul.f32 %v244, 0.2
    %v247 = vsel %vm245, %v244, %v246
    %v248 = vlaneseq
    %v249 = vshrl.u32 %v248, 7
    %v250 = vsub.s32 3, %v249
    %v251 = vrot.slane %v82, %v250
    %v252 = vmul.f32 %v247, %v251
    %253 = vadd.xlane.f32.xlu0 %v252
    %v254 = vpop.xlane.xlu0 %253
    %s255 = sld [smem:[#allocation2]]
    %v256 = vstv %s255
    %v257 = vadd.f32 %v254, %v256
    %v259 = vlaneseq
    %v260 = vand.u32 %v259, 127
    %v261 = vlaneseq
    %v262 = vshrl.u32 %v261, 7
    %v263 = vsub.s32 %v260, %v262
    %v264 = vrot.slane %v257, %v263
    %vm266 = vcmask 57344
    %267 = vst.msk [vmem:[#allocation8] sm:$0x1] %vm266, %v264
    // Predicated region
    $region26: #{tpu_custom_call.1} parent=1 // pred_check
      _
    $region27: #{tpu_custom_call.1} parent=1 // pred_check_branch
      %269 = sbr.rel (0) target = $region29
    $region28: #{tpu_custom_call.1} parent=1 // pred_region
      %s271 = ssub.s32 16, 16
      %272 = vsyncadd [#allocation5], %s271
      %s274 = sshll.u32 [#allocation8], 4
      %s275 = int_to_ptr.vmem [resolvable:$true] %s274
      %277 = dma.vmem_to_hbm [thread:$0]  %s275, 16, %s4, [#allocation5]
    $region29: #{tpu_custom_call.1} parent=1 // pred_fallthru
      _
    // Predicated region
    $region30: #{tpu_custom_call.1} parent=1 // pred_check
      _
    $region31: #{tpu_custom_call.1} parent=1 // pred_check_branch
      %279 = sbr.rel (0) target = $region33
    $region32: #{tpu_custom_call.1} parent=1 // pred_region
      %280 = dma.done [#allocation5], 16
    $region33: #{tpu_custom_call.1} parent=1 // pred_fallthru
      _
    %281 = vsyncpa [#allocation4], 1
    %282 = vsyncpa [#allocation7], 1
    %283 = vsyncpa [#allocation5], 1

</llo_original>
